<compile_context>
chip_gen: v6e
topology: v6e:2x2x1
jax: 0.10.0
libtpu: 0.0.40
codegen_flags: <defaults>
</compile_context>

<pallas_src>
import functools

import jax
import jax.numpy as jnp
from jax.experimental import pallas as pl
from jax.experimental.pallas import tpu as pltpu


def policy_kernel(x_ref, w1_ref, b1_ref, w2_ref, b2_ref, out_ref):
    """fc1 -> ReLU -> fc2 -> softmax over one batch tile.

    Padded action lanes carry logits == -1e30 (baked into the b2 padding at
    parameter-prep time): exp underflows to 0, so the softmax over the real
    actions is unchanged without any in-kernel masking.
    """
    x = x_ref[...]
    h = jnp.dot(x, w1_ref[...], preferred_element_type=jnp.float32) + b1_ref[...]
    h = jnp.maximum(h, 0.0)
    logits = jnp.dot(h, w2_ref[...], preferred_element_type=jnp.float32) + b2_ref[...]
    # Numerically stable softmax over dim=1.
    m = jnp.max(logits, axis=1, keepdims=True)
    e = jnp.exp(logits - m)
    denom = jnp.sum(e, axis=1, keepdims=True)
    # Exact divide (not approx reciprocal): rows must sum to 1 for downstream
    # Categorical sampling / log_prob; denom is [tb, 1] so the cost is tiny.
    out_ref[...] = (e / denom).astype(out_ref.dtype)


def prepare_params(w1, b1, w2, b2):
    """One-time (init-time) parameter prep, hoisted out of the hot loop.

    The action axis is lane-padded up to a multiple of 128:
      * w2 padded with zeros
      * b2 padded with -1e30  -> padded logits become exactly -1e30
    """
    A = w2.shape[1]
    a_pad = max(128, pl.cdiv(A, 128) * 128)
    w2_p = jnp.pad(w2, ((0, 0), (0, a_pad - A)))
    b2_p = jnp.pad(b2, ((0, 0), (0, a_pad - A)), constant_values=-1e30)
    return w1, b1, w2_p, b2_p


@functools.partial(jax.jit, static_argnames=("n_actions", "tb"))
def policy_forward(x, w1, b1, w2_p, b2_p, *, n_actions, tb=512):
    """x: [B, S]; w1: [S, H]; b1: [1, H]; w2_p: [H, A_pad]; b2_p: [1, A_pad].

    Returns softmax probabilities [B, n_actions]. jit-ed so the batch pad and
    the final slice fuse into one dispatch with the pallas_call.
    """
    B, S = x.shape
    H, A_pad = w2_p.shape

    # Batch tiling: pick a tile count/size that minimizes padding (at most one
    # extra 8-row sublane group) rather than rounding B up to a full tb tile.
    b8 = ((B + 7) // 8) * 8
    if b8 <= tb:
        num_tiles = 1                     # tiny batch: single tile, no pipeline overhead
        tb_eff = b8
    else:
        num_tiles = pl.cdiv(b8, tb)       # >=2 tiles -> "parallel" can use both v7x TCs
        tb_eff = ((pl.cdiv(b8, num_tiles) + 7) // 8) * 8
    B_pad = num_tiles * tb_eff
    x_p = jnp.pad(x, ((0, B_pad - B), (0, 0)))

    out = pl.pallas_call(
        policy_kernel,
        out_shape=jax.ShapeDtypeStruct((B_pad, A_pad), jnp.float32),
        grid=(num_tiles,),
        in_specs=[
            pl.BlockSpec((tb_eff, S), lambda i: (i, 0)),   # x tile marches over batch
            pl.BlockSpec((S, H), lambda i: (0, 0)),        # w1 VMEM-resident
            pl.BlockSpec((1, H), lambda i: (0, 0)),        # b1 VMEM-resident
            pl.BlockSpec((H, A_pad), lambda i: (0, 0)),    # w2 (zero-padded) resident
            pl.BlockSpec((1, A_pad), lambda i: (0, 0)),    # b2 (-1e30-padded) resident
        ],
        out_specs=pl.BlockSpec((tb_eff, A_pad), lambda i: (i, 0)),
        compiler_params=pltpu.CompilerParams(
            dimension_semantics=("parallel",),  # shard batch tiles across TCs on v7x
        ),
    )(x_p, w1, b1, w2_p, b2_p)

    return out[:B, :n_actions]


if __name__ == "__main__":
    # Shapes consistent with the module: hidden_size=128 (PyTorch default),
    # small state/action sizes, modest batch of states per call.
    batch, state_size, hidden_size, action_size = 64, 16, 128, 8

    key = jax.random.PRNGKey(0)
    k_x, k_w1, k_b1, k_w2, k_b2 = jax.random.split(key, 5)

    x = jax.random.normal(k_x, (batch, state_size), dtype=jnp.float32)

    # Deterministic param init (mimics PyTorch Linear uniform(-1/sqrt(fan_in), 1/sqrt(fan_in)))
    bound1 = 1.0 / (state_size ** 0.5)
    w1 = jax.random.uniform(k_w1, (state_size, hidden_size), jnp.float32, -bound1, bound1)
    b1 = jax.random.uniform(k_b1, (1, hidden_size), jnp.float32, -bound1, bound1)
    bound2 = 1.0 / (hidden_size ** 0.5)
    w2 = jax.random.uniform(k_w2, (hidden_size, action_size), jnp.float32, -bound2, bound2)
    b2 = jax.random.uniform(k_b2, (1, action_size), jnp.float32, -bound2, bound2)

    # One-time parameter prep (lane padding + mask baked into b2), outside the hot path.
    w1_r, b1_r, w2_p, b2_p = prepare_params(w1, b1, w2, b2)

    probs = policy_forward(x, w1_r, b1_r, w2_p, b2_p, n_actions=action_size)
    jax.block_until_ready(probs)

    # Reference (pure JAX) forward.
    ref = jax.nn.softmax(jnp.maximum(x @ w1 + b1, 0.0) @ w2 + b2, axis=1)

    assert probs.shape == (batch, action_size)
    # Exact divide -> rows sum to 1 up to f32 rounding.
    assert jnp.allclose(jnp.sum(probs, axis=1), 1.0, atol=1e-5)
    assert jnp.allclose(probs, ref, atol=1e-3)

    # TODO(synk): act() (Categorical sampling / log_prob) is host-side policy
    # logic outside the forward pass and is not implemented as a kernel.
    print("KERNEL_OK")
</pallas_src>

<mosaic_0001>
module attributes {stable_mosaic.version = 11 : i64} {
  func.func @policy_kernel(%arg0: i32, %arg1: memref<64x16xf32, #tpu.memory_space<vmem>>, %arg2: memref<16x128xf32, #tpu.memory_space<vmem>>, %arg3: memref<1x128xf32, #tpu.memory_space<vmem>>, %arg4: memref<128x128xf32, #tpu.memory_space<vmem>>, %arg5: memref<1x128xf32, #tpu.memory_space<vmem>>, %arg6: memref<64x128xf32, #tpu.memory_space<vmem>>) attributes {dimension_semantics = [#tpu.dimension_semantics<parallel>], iteration_bounds = array<i64: 1>, scalar_prefetch = 0 : i64, scratch_operands = 0 : i64, tpu.core_type = #tpu.core_type<tc>, window_params = [{transform_indices = @transform_0, window_bounds = array<i64: 64, 16>}, {pipeline_mode = #tpu.pipeline_mode<synchronous>, transform_indices = @transform_1, window_bounds = array<i64: 16, 128>}, {pipeline_mode = #tpu.pipeline_mode<synchronous>, transform_indices = @transform_2, window_bounds = array<i64: 1, 128>}, {pipeline_mode = #tpu.pipeline_mode<synchronous>, transform_indices = @transform_3, window_bounds = array<i64: 128, 128>}, {pipeline_mode = #tpu.pipeline_mode<synchronous>, transform_indices = @transform_4, window_bounds = array<i64: 1, 128>}, {transform_indices = @transform_5, window_bounds = array<i64: 64, 128>}]} {
    %c0 = arith.constant 0 : index
    %c0_0 = arith.constant 0 : index
    %0 = vector.load %arg1[%c0, %c0_0] : memref<64x16xf32, #tpu.memory_space<vmem>>, vector<64x16xf32>
    %c0_1 = arith.constant 0 : index
    %c0_2 = arith.constant 0 : index
    %1 = vector.load %arg2[%c0_1, %c0_2] : memref<16x128xf32, #tpu.memory_space<vmem>>, vector<16x128xf32>
    %cst = arith.constant dense<0.000000e+00> : vector<64x128xf32>
    %2 = tpu.matmul %0, %1, %cst {dimension_numbers = #tpu.dot_dimension_numbers<[1], [0], [0], [1], [0, 0, 1, 1], [], []>} : vector<64x16xf32>, vector<16x128xf32>, vector<64x128xf32> -> vector<64x128xf32>
    %c0_3 = arith.constant 0 : index
    %c0_4 = arith.constant 0 : index
    %3 = vector.load %arg3[%c0_3, %c0_4] : memref<1x128xf32, #tpu.memory_space<vmem>>, vector<1x128xf32>
    %4 = vector.broadcast %3 : vector<1x128xf32> to vector<64x128xf32>
    %5 = arith.addf %2, %4 : vector<64x128xf32>
    %cst_5 = arith.constant 0.000000e+00 : f32
    %6 = vector.broadcast %cst_5 : f32 to vector<64x128xf32>
    %7 = arith.maximumf %5, %6 : vector<64x128xf32>
    %c0_6 = arith.constant 0 : index
    %c0_7 = arith.constant 0 : index
    %8 = vector.load %arg4[%c0_6, %c0_7] : memref<128x128xf32, #tpu.memory_space<vmem>>, vector<128x128xf32>
    %cst_8 = arith.constant dense<0.000000e+00> : vector<64x128xf32>
    %9 = tpu.matmul %7, %8, %cst_8 {dimension_numbers = #tpu.dot_dimension_numbers<[1], [0], [0], [1], [0, 0, 1, 1], [], []>} : vector<64x128xf32>, vector<128x128xf32>, vector<64x128xf32> -> vector<64x128xf32>
    %c0_9 = arith.constant 0 : index
    %c0_10 = arith.constant 0 : index
    %10 = vector.load %arg5[%c0_9, %c0_10] : memref<1x128xf32, #tpu.memory_space<vmem>>, vector<1x128xf32>
    %11 = vector.broadcast %10 : vector<1x128xf32> to vector<64x128xf32>
    %12 = arith.addf %9, %11 : vector<64x128xf32>
    %cst_11 = arith.constant dense<0xFF800000> : vector<64xf32>
    %13 = vector.multi_reduction <maximumf>, %12, %cst_11 [1] : vector<64x128xf32> to vector<64xf32>
    %14 = vector.shape_cast %13 : vector<64xf32> to vector<64x1xf32>
    %15 = vector.broadcast %14 : vector<64x1xf32> to vector<64x128xf32>
    %16 = arith.subf %12, %15 : vector<64x128xf32>
    %17 = math.exp %16 : vector<64x128xf32>
    %cst_12 = arith.constant dense<0.000000e+00> : vector<64xf32>
    %18 = vector.multi_reduction <add>, %17, %cst_12 [1] : vector<64x128xf32> to vector<64xf32>
    %19 = vector.shape_cast %18 : vector<64xf32> to vector<64x1xf32>
    %20 = vector.broadcast %19 : vector<64x1xf32> to vector<64x128xf32>
    %21 = arith.divf %17, %20 : vector<64x128xf32>
    %c0_13 = arith.constant 0 : index
    %c0_14 = arith.constant 0 : index
    %22 = vector.load %arg6[%c0_13, %c0_14] : memref<64x128xf32, #tpu.memory_space<vmem>>, vector<64x128xf32>
    tpu.vector_store %arg6[%c0_13, %c0_14], %21 {strides = array<i32>} : memref<64x128xf32, #tpu.memory_space<vmem>>, vector<64x128xf32>,
    return
  }
  func.func @transform_0(%arg0: i32) -> (i32, i32) {
    %c0_i32 = arith.constant 0 : i32
    %c0_i32_0 = arith.constant 0 : i32
    return %arg0, %c0_i32 : i32, i32
  }
  func.func @transform_1(%arg0: i32) -> (i32, i32) {
    %c0_i32 = arith.constant 0 : i32
    %c0_i32_0 = arith.constant 0 : i32
    %c0_i32_1 = arith.constant 0 : i32
    return %c0_i32, %c0_i32_0 : i32, i32
  }
  func.func @transform_2(%arg0: i32) -> (i32, i32) {
    %c0_i32 = arith.constant 0 : i32
    %c0_i32_0 = arith.constant 0 : i32
    %c0_i32_1 = arith.constant 0 : i32
    return %c0_i32, %c0_i32_0 : i32, i32
  }
  func.func @transform_3(%arg0: i32) -> (i32, i32) {
    %c0_i32 = arith.constant 0 : i32
    %c0_i32_0 = arith.constant 0 : i32
    %c0_i32_1 = arith.constant 0 : i32
    return %c0_i32, %c0_i32_0 : i32, i32
  }
  func.func @transform_4(%arg0: i32) -> (i32, i32) {
    %c0_i32 = arith.constant 0 : i32
    %c0_i32_0 = arith.constant 0 : i32
    %c0_i32_1 = arith.constant 0 : i32
    return %c0_i32, %c0_i32_0 : i32, i32
  }
  func.func @transform_5(%arg0: i32) -> (i32, i32) {
    %c0_i32 = arith.constant 0 : i32
    %c0_i32_0 = arith.constant 0 : i32
    return %arg0, %c0_i32 : i32, i32
  }
}

</mosaic_0001>

<llo_original>
// kernel: policy_forward.1
$region0: #{policy_forward.1}
  #allocation0 [shape = 'u32[]', space=smem, size = 0x4, offset = 0x4, fixed_abs, tag = 'smem constant byte address 0x4 - core index']
  #allocation1 [shape = 'u32[144,128]{1,0:T(1,128)}', space=vmem, size = 0x12000, scoped, tag = 'internal scratch']
  %s0 = inlined_call_operand.vmem [shape: f32[64,16], index: 0, kind: input, shape index: {}]
  %s1 = inlined_call_operand.vmem [shape: f32[16,128], index: 1, kind: input, shape index: {}]
  %s2 = inlined_call_operand.vmem [shape: f32[1,128], index: 2, kind: input, shape index: {}]
  %s3 = inlined_call_operand.hbm [shape: f32[128,128], index: 3, kind: input, shape index: {}]
  %s4 = inlined_call_operand.vmem [shape: f32[1,128], index: 4, kind: input, shape index: {}]
  %s5 = inlined_call_operand.vmem [shape: f32[64,128], index: 5, kind: output, shape index: {}]
  %s6 = sld [smem:[#allocation0]]
  $region34: #{policy_forward.1} parent=0
    _
  %s8 = ssub.s32 1, %s6
  %s9 = scalar_select 0, %s8, %s6
  $region1: #{policy_forward.1} parent=0
    #allocation2 [shape = 'u8[65536]{0}', space=vmem, size = 0x10000, scoped, tag = 'input window, operand 3, single buffered']
    #allocation3 [shape = 's32[1]{0}', space=sflag, size = 0x4, scoped, tag = 'scoped memory for policy_forward.1']
    %10 = vsyncpa [#allocation3], 0
    // Predicated region
    $region2: #{policy_forward.1} parent=1 // pred_check
      _
    $region3: #{policy_forward.1} parent=1 // pred_check_branch
      %12 = sbr.rel (0) target = $region5
    $region4: #{policy_forward.1} parent=1 // pred_region
      _
    $region5: #{policy_forward.1} parent=1 // pred_fallthru
      _
    // Predicated region
    $region6: #{policy_forward.1} parent=1 // pred_check
      _
    $region7: #{policy_forward.1} parent=1 // pred_check_branch
      %14 = sbr.rel (0) target = $region9
    $region8: #{policy_forward.1} parent=1 // pred_region
      _
    $region9: #{policy_forward.1} parent=1 // pred_fallthru
      _
    // Predicated region
    $region10: #{policy_forward.1} parent=1 // pred_check
      _
    $region11: #{policy_forward.1} parent=1 // pred_check_branch
      %16 = sbr.rel (0) target = $region13
    $region12: #{policy_forward.1} parent=1 // pred_region
      _
    $region13: #{policy_forward.1} parent=1 // pred_fallthru
      _
    // Predicated region
    $region14: #{policy_forward.1} parent=1 // pred_check
      _
    $region15: #{policy_forward.1} parent=1 // pred_check_branch
      %18 = sbr.rel (0) target = $region17
    $region16: #{policy_forward.1} parent=1 // pred_region
      %s20 = ssub.s32 2048, 2048
      %21 = vsyncadd [#allocation3], %s20
      %s22 = sshll.u32 [#allocation2], 4
      %s23 = int_to_ptr.vmem [resolvable:$true] %s22
      %28 = dma.hbm_to_vmem [thread:$0]  %s3, 2048, %s23, [#allocation3], 128, 128, 8
    $region17: #{policy_forward.1} parent=1 // pred_fallthru
      _
    // Predicated region
    $region18: #{policy_forward.1} parent=1 // pred_check
      _
    $region19: #{policy_forward.1} parent=1 // pred_check_branch
      %30 = sbr.rel (0) target = $region21
    $region20: #{policy_forward.1} parent=1 // pred_region
      _
    $region21: #{policy_forward.1} parent=1 // pred_fallthru
      _
    // Predicated region
    $region22: #{policy_forward.1} parent=1 // pred_check
      _
    $region23: #{policy_forward.1} parent=1 // pred_check_branch
      %32 = sbr.rel (0) target = $region25
    $region24: #{policy_forward.1} parent=1 // pred_region
      %33 = dma.done [#allocation3], 2048
    $region25: #{policy_forward.1} parent=1 // pred_fallthru
      _
    %v34 = vld [vmem:[%s0] sm:$0xff]
    %v35 = vld [vmem:[%s0 + $0x8] sm:$0xff]
    %v36 = vld [vmem:[%s0 + $0x10] sm:$0xff]
    %v37 = vld [vmem:[%s0 + $0x18] sm:$0xff]
    %v38 = vld [vmem:[%s0 + $0x20] sm:$0xff]
    %v39 = vld [vmem:[%s0 + $0x28] sm:$0xff]
    %v40 = vld [vmem:[%s0 + $0x30] sm:$0xff]
    %v41 = vld [vmem:[%s0 + $0x38] sm:$0xff]
    %v42 = vld [vmem:[%s1] sm:$0xff]
    %v43 = vld [vmem:[%s1 + $0x8] sm:$0xff]
    %v44 = vld [vmem:[%s2] sm:$0x1]
    %v46 = vlaneseq
    %v47 = vshrl.u32 %v46, 7
    %v48 = vsub.s32 0, %v47
    %v49 = vrot.slane %v44, %v48
    %vm51 = vcmask 130048
    %v53 = vsel %vm51, %v34, 0
    %v56 = vsel %vm51, %v35, 0
    %v59 = vsel %vm51, %v36, 0
    %v62 = vsel %vm51, %v37, 0
    %v65 = vsel %vm51, %v38, 0
    %v68 = vsel %vm51, %v39, 0
    %v71 = vsel %vm51, %v40, 0
    %v74 = vsel %vm51, %v41, 0
    %76 = vmatprep.subr.mxu0 0.0
    %77 = vmatpush1.msra.mxu0 0.0
    %78 = vmatprep.subr.mxu0 0.0
    %79 = vmatpush1.msra.mxu0 0.0
    %80 = vmatprep.subr.mxu0 0.0
    %81 = vmatpush1.msra.mxu0 0.0
    %82 = vmatprep.subr.mxu0 0.0
    %83 = vmatpush1.msra.mxu0 0.0
    %84 = vmatprep.subr.mxu0 0.0
    %85 = vmatpush1.msra.mxu0 0.0
    %86 = vmatprep.subr.mxu0 0.0
    %87 = vmatpush1.msra.mxu0 0.0
    %88 = vmatprep.subr.mxu0 0.0
    %89 = vmatpush1.msra.mxu0 0.0
    %90 = vmatprep.subr.mxu0 0.0
    %91 = vmatpush1.msra.mxu0 0.0
    %92 = vmatprep.subr.mxu0 0.0
    %93 = vmatpush1.msra.mxu0 0.0
    %94 = vmatprep.subr.mxu0 0.0
    %95 = vmatpush1.msra.mxu0 0.0
    %96 = vmatprep.subr.mxu0 0.0
    %97 = vmatpush1.msra.mxu0 0.0
    %98 = vmatprep.subr.mxu0 0.0
    %99 = vmatpush1.msra.mxu0 0.0
    %100 = vmatprep.subr.mxu0 0.0
    %101 = vmatpush1.msra.mxu0 0.0
    %102 = vmatprep.subr.mxu0 0.0
    %103 = vmatpush1.msra.mxu0 0.0
    %104 = vmatprep.subr.mxu0 0.0
    %105 = vmatpush1.msra.mxu0 %v43
    %106 = vmatprep.subr.mxu0 0.0
    %107 = vmatpush1.msra.mxu0 %v42
    %108 = vmatprep.subr.mxu0 0.0
    %109 = vmatpush2.msra.mxu0 0.0
    %110 = vmatprep.subr.mxu0 0.0
    %111 = vmatpush2.msra.mxu0 0.0
    %112 = vmatprep.subr.mxu0 0.0
    %113 = vmatpush2.msra.mxu0 0.0
    %114 = vmatprep.subr.mxu0 0.0
    %115 = vmatpush2.msra.mxu0 0.0
    %116 = vmatprep.subr.mxu0 0.0
    %117 = vmatpush2.msra.mxu0 0.0
    %118 = vmatprep.subr.mxu0 0.0
    %119 = vmatpush2.msra.mxu0 0.0
    %120 = vmatprep.subr.mxu0 0.0
    %121 = vmatpush2.msra.mxu0 0.0
    %122 = vmatprep.subr.mxu0 0.0
    %123 = vmatpush2.msra.mxu0 0.0
    %124 = vmatprep.subr.mxu0 0.0
    %125 = vmatpush2.msra.mxu0 0.0
    %126 = vmatprep.subr.mxu0 0.0
    %127 = vmatpush2.msra.mxu0 0.0
    %128 = vmatprep.subr.mxu0 0.0
    %129 = vmatpush2.msra.mxu0 0.0
    %130 = vmatprep.subr.mxu0 0.0
    %131 = vmatpush2.msra.mxu0 0.0
    %132 = vmatprep.subr.mxu0 0.0
    %133 = vmatpush2.msra.mxu0 0.0
    %134 = vmatprep.subr.mxu0 0.0
    %135 = vmatpush2.msra.mxu0 0.0
    %136 = vmatprep.subr.mxu0 0.0
    %137 = vmatpush2.msra.mxu0 0.0
    %138 = vmatprep.subr.mxu0 0.0
    %139 = vmatpush2.msra.mxu0 0.0
    %140 = vmatprep.mubr.f32.mxu0 0.0
    %141 = vmatmul.mubr.f32.gmra.mxu0 %v53
    %v142 = vpop.f32.mrf.mxu0
    %v143 = vadd.f32 %v49, %v142
    %v144 = vpop.f32.mrf.mxu0
    %145 = vmatprep.mubr.f32.mxu0 0.0
    %146 = vmatmul.mubr.f32.gmra.mxu0 %v56
    %v147 = vpop.f32.mrf.mxu0
    %v148 = vadd.f32 %v49, %v147
    %v149 = vpop.f32.mrf.mxu0
    %150 = vmatprep.mubr.f32.mxu0 0.0
    %151 = vmatmul.mubr.f32.gmra.mxu0 %v59
    %v152 = vpop.f32.mrf.mxu0
    %v153 = vadd.f32 %v49, %v152
    %v154 = vpop.f32.mrf.mxu0
    %155 = vmatprep.mubr.f32.mxu0 0.0
    %156 = vmatmul.mubr.f32.gmra.mxu0 %v62
    %v157 = vpop.f32.mrf.mxu0
    %v158 = vadd.f32 %v49, %v157
    %v159 = vpop.f32.mrf.mxu0
    %160 = vmatprep.mubr.f32.mxu0 0.0
    %161 = vmatmul.mubr.f32.gmra.mxu0 %v65
    %v162 = vpop.f32.mrf.mxu0
    %v163 = vadd.f32 %v49, %v162
    %v164 = vpop.f32.mrf.mxu0
    %165 = vmatprep.mubr.f32.mxu0 0.0
    %166 = vmatmul.mubr.f32.gmra.mxu0 %v68
    %v167 = vpop.f32.mrf.mxu0
    %v168 = vadd.f32 %v49, %v167
    %v169 = vpop.f32.mrf.mxu0
    %170 = vmatprep.mubr.f32.mxu0 0.0
    %171 = vmatmul.mubr.f32.gmra.mxu0 %v71
    %v172 = vpop.f32.mrf.mxu0
    %v173 = vadd.f32 %v49, %v172
    %v174 = vpop.f32.mrf.mxu0
    %175 = vmatprep.mubr.f32.mxu0 0.0
    %176 = vmatmul.mubr.f32.gmra.mxu0 %v74
    %v177 = vpop.f32.mrf.mxu0
    %v178 = vadd.f32 %v49, %v177
    %v179 = vpop.f32.mrf.mxu0
    %180 = vdwg.mxu0
    %v181 = vmax.f32 %v143, 0.0
    %v182 = vmax.f32 %v148, 0.0
    %v183 = vmax.f32 %v153, 0.0
    %v184 = vmax.f32 %v158, 0.0
    %v185 = vmax.f32 %v163, 0.0
    %v186 = vmax.f32 %v168, 0.0
    %v187 = vmax.f32 %v173, 0.0
    %v188 = vmax.f32 %v178, 0.0
    %v189 = vld [vmem:[#allocation2] sm:$0xff]
    %v190 = vld [vmem:[#allocation2 + $0x8] sm:$0xff]
    %v191 = vld [vmem:[#allocation2 + $0x10] sm:$0xff]
    %v192 = vld [vmem:[#allocation2 + $0x18] sm:$0xff]
    %v193 = vld [vmem:[#allocation2 + $0x20] sm:$0xff]
    %v194 = vld [vmem:[#allocation2 + $0x28] sm:$0xff]
    %v195 = vld [vmem:[#allocation2 + $0x30] sm:$0xff]
    %v196 = vld [vmem:[#allocation2 + $0x38] sm:$0xff]
    %v197 = vld [vmem:[#allocation2 + $0x40] sm:$0xff]
    %v198 = vld [vmem:[#allocation2 + $0x48] sm:$0xff]
    %v199 = vld [vmem:[#allocation2 + $0x50] sm:$0xff]
    %v200 = vld [vmem:[#allocation2 + $0x58] sm:$0xff]
    %v201 = vld [vmem:[#allocation2 + $0x60] sm:$0xff]
    %v202 = vld [vmem:[#allocation2 + $0x68] sm:$0xff]
    %v203 = vld [vmem:[#allocation2 + $0x70] sm:$0xff]
    %v204 = vld [vmem:[#allocation2 + $0x78] sm:$0xff]
    %v205 = vld [vmem:[%s4] sm:$0x1]
    %v207 = vlaneseq
    %v208 = vshrl.u32 %v207, 7
    %v209 = vsub.s32 0, %v208
    %v210 = vrot.slane %v205, %v209
    %212 = vmatprep.subr.mxu0 0.0
    %213 = vmatpush1.msra.mxu0 %v204
    %214 = vmatprep.subr.mxu0 0.0
    %215 = vmatpush1.msra.mxu0 %v203
    %216 = vmatprep.subr.mxu0 0.0
    %217 = vmatpush1.msra.mxu0 %v202
    %218 = vmatprep.subr.mxu0 0.0
    %219 = vmatpush1.msra.mxu0 %v201
    %220 = vmatprep.subr.mxu0 0.0
    %221 = vmatpush1.msra.mxu0 %v200
    %222 = vmatprep.subr.mxu0 0.0
    %223 = vmatpush1.msra.mxu0 %v199
    %224 = vmatprep.subr.mxu0 0.0
    %225 = vmatpush1.msra.mxu0 %v198
    %226 = vmatprep.subr.mxu0 0.0
    %227 = vmatpush1.msra.mxu0 %v197
    %228 = vmatprep.subr.mxu0 0.0
    %229 = vmatpush1.msra.mxu0 %v196
    %230 = vmatprep.subr.mxu0 0.0
    %231 = vmatpush1.msra.mxu0 %v195
    %232 = vmatprep.subr.mxu0 0.0
    %233 = vmatpush1.msra.mxu0 %v194
    %234 = vmatprep.subr.mxu0 0.0
    %235 = vmatpush1.msra.mxu0 %v193
    %236 = vmatprep.subr.mxu0 0.0
    %237 = vmatpush1.msra.mxu0 %v192
    %238 = vmatprep.subr.mxu0 0.0
    %239 = vmatpush1.msra.mxu0 %v191
    %240 = vmatprep.subr.mxu0 0.0
    %241 = vmatpush1.msra.mxu0 %v190
    %242 = vmatprep.subr.mxu0 0.0
    %243 = vmatpush1.msra.mxu0 %v189
    %244 = vmatprep.subr.mxu0 0.0
    %245 = vmatpush2.msra.mxu0 0.0
    %246 = vmatprep.subr.mxu0 0.0
    %247 = vmatpush2.msra.mxu0 0.0
    %248 = vmatprep.subr.mxu0 0.0
    %249 = vmatpush2.msra.mxu0 0.0
    %250 = vmatprep.subr.mxu0 0.0
    %251 = vmatpush2.msra.mxu0 0.0
    %252 = vmatprep.subr.mxu0 0.0
    %253 = vmatpush2.msra.mxu0 0.0
    %254 = vmatprep.subr.mxu0 0.0
    %255 = vmatpush2.msra.mxu0 0.0
    %256 = vmatprep.subr.mxu0 0.0
    %257 = vmatpush2.msra.mxu0 0.0
    %258 = vmatprep.subr.mxu0 0.0
    %259 = vmatpush2.msra.mxu0 0.0
    %260 = vmatprep.subr.mxu0 0.0
    %261 = vmatpush2.msra.mxu0 0.0
    %262 = vmatprep.subr.mxu0 0.0
    %263 = vmatpush2.msra.mxu0 0.0
    %264 = vmatprep.subr.mxu0 0.0
    %265 = vmatpush2.msra.mxu0 0.0
    %266 = vmatprep.subr.mxu0 0.0
    %267 = vmatpush2.msra.mxu0 0.0
    %268 = vmatprep.subr.mxu0 0.0
    %269 = vmatpush2.msra.mxu0 0.0
    %270 = vmatprep.subr.mxu0 0.0
    %271 = vmatpush2.msra.mxu0 0.0
    %272 = vmatprep.subr.mxu0 0.0
    %273 = vmatpush2.msra.mxu0 0.0
    %274 = vmatprep.subr.mxu0 0.0
    %275 = vmatpush2.msra.mxu0 0.0
    %276 = vmatprep.mubr.f32.mxu0 0.0
    %277 = vmatmul.mubr.f32.gmra.mxu0 %v181
    %v278 = vpop.f32.mrf.mxu0
    %v279 = vadd.f32 %v210, %v278
    %v280 = vpop.f32.mrf.mxu0
    %281 = vmatprep.mubr.f32.mxu0 0.0
    %282 = vmatmul.mubr.f32.gmra.mxu0 %v182
    %v283 = vpop.f32.mrf.mxu0
    %v284 = vadd.f32 %v210, %v283
    %v285 = vpop.f32.mrf.mxu0
    %286 = vmatprep.mubr.f32.mxu0 0.0
    %287 = vmatmul.mubr.f32.gmra.mxu0 %v183
    %v288 = vpop.f32.mrf.mxu0
    %v289 = vadd.f32 %v210, %v288
    %v290 = vpop.f32.mrf.mxu0
    %291 = vmatprep.mubr.f32.mxu0 0.0
    %292 = vmatmul.mubr.f32.gmra.mxu0 %v184
    %v293 = vpop.f32.mrf.mxu0
    %v294 = vadd.f32 %v210, %v293
    %v295 = vpop.f32.mrf.mxu0
    %296 = vmatprep.mubr.f32.mxu0 0.0
    %297 = vmatmul.mubr.f32.gmra.mxu0 %v185
    %v298 = vpop.f32.mrf.mxu0
    %v299 = vadd.f32 %v210, %v298
    %v300 = vpop.f32.mrf.mxu0
    %301 = vmatprep.mubr.f32.mxu0 0.0
    %302 = vmatmul.mubr.f32.gmra.mxu0 %v186
    %v303 = vpop.f32.mrf.mxu0
    %v304 = vadd.f32 %v210, %v303
    %v305 = vpop.f32.mrf.mxu0
    %306 = vmatprep.mubr.f32.mxu0 0.0
    %307 = vmatmul.mubr.f32.gmra.mxu0 %v187
    %v308 = vpop.f32.mrf.mxu0
    %v309 = vadd.f32 %v210, %v308
    %v310 = vpop.f32.mrf.mxu0
    %311 = vmatprep.mubr.f32.mxu0 0.0
    %312 = vmatmul.mubr.f32.gmra.mxu0 %v188
    %v313 = vpop.f32.mrf.mxu0
    %v314 = vadd.f32 %v210, %v313
    %v315 = vpop.f32.mrf.mxu0
    %316 = vdwg.mxu0
    %317 = vmax.xlane.f32.xlu0 %v279
    %v318 = vpop.xlane.xlu0 %317
    %319 = vmax.xlane.f32.xlu0 %v284
    %v320 = vpop.xlane.xlu0 %319
    %321 = vmax.xlane.f32.xlu0 %v289
    %v322 = vpop.xlane.xlu0 %321
    %323 = vmax.xlane.f32.xlu0 %v294
    %v324 = vpop.xlane.xlu0 %323
    %325 = vmax.xlane.f32.xlu0 %v299
    %v326 = vpop.xlane.xlu0 %325
    %327 = vmax.xlane.f32.xlu0 %v304
    %v328 = vpop.xlane.xlu0 %327
    %329 = vmax.xlane.f32.xlu0 %v309
    %v330 = vpop.xlane.xlu0 %329
    %331 = vmax.xlane.f32.xlu0 %v314
    %v332 = vpop.xlane.xlu0 %331
    %v333 = vsub.f32 %v279, %v318
    %v334 = vsub.f32 %v284, %v320
    %v335 = vsub.f32 %v289, %v322
    %v336 = vsub.f32 %v294, %v324
    %v337 = vsub.f32 %v299, %v326
    %v338 = vsub.f32 %v304, %v328
    %v339 = vsub.f32 %v309, %v330
    %v340 = vsub.f32 %v314, %v332
    %v341 = vmul.f32 %v333, 1.442695
    %v342 = vpow.pop %v341
    %v343 = vmul.f32 %v334, 1.442695
    %v344 = vpow.pop %v343
    %v345 = vmul.f32 %v335, 1.442695
    %v346 = vpow.pop %v345
    %v347 = vmul.f32 %v336, 1.442695
    %v348 = vpow.pop %v347
    %v349 = vmul.f32 %v337, 1.442695
    %v350 = vpow.pop %v349
    %v351 = vmul.f32 %v338, 1.442695
    %v352 = vpow.pop %v351
    %v353 = vmul.f32 %v339, 1.442695
    %v354 = vpow.pop %v353
    %v355 = vmul.f32 %v340, 1.442695
    %v356 = vpow.pop %v355
    %357 = vadd.xlane.f32.xlu0 %v342
    %v358 = vpop.xlane.xlu0 %357
    %359 = vadd.xlane.f32.xlu0 %v344
    %v360 = vpop.xlane.xlu0 %359
    %361 = vadd.xlane.f32.xlu0 %v346
    %v362 = vpop.xlane.xlu0 %361
    %363 = vadd.xlane.f32.xlu0 %v348
    %v364 = vpop.xlane.xlu0 %363
    %365 = vadd.xlane.f32.xlu0 %v350
    %v366 = vpop.xlane.xlu0 %365
    %367 = vadd.xlane.f32.xlu0 %v352
    %v368 = vpop.xlane.xlu0 %367
    %369 = vadd.xlane.f32.xlu0 %v354
    %v370 = vpop.xlane.xlu0 %369
    %371 = vadd.xlane.f32.xlu0 %v356
    %v372 = vpop.xlane.xlu0 %371
    %v373 = vrcp.pop %v358
    %v374 = vmul.f32 %v342, %v373
    %v375 = vrcp.pop %v360
    %v376 = vmul.f32 %v344, %v375
    %v377 = vrcp.pop %v362
    %v378 = vmul.f32 %v346, %v377
    %v379 = vrcp.pop %v364
    %v380 = vmul.f32 %v348, %v379
    %v381 = vrcp.pop %v366
    %v382 = vmul.f32 %v350, %v381
    %v383 = vrcp.pop %v368
    %v384 = vmul.f32 %v352, %v383
    %v385 = vrcp.pop %v370
    %v386 = vmul.f32 %v354, %v385
    %v387 = vrcp.pop %v372
    %v388 = vmul.f32 %v356, %v387
    %389 = vst [vmem:[%s5] sm:$0xff] %v374
    %390 = vst [vmem:[%s5 + $0x8] sm:$0xff] %v376
    %391 = vst [vmem:[%s5 + $0x10] sm:$0xff] %v378
    %392 = vst [vmem:[%s5 + $0x18] sm:$0xff] %v380
    %393 = vst [vmem:[%s5 + $0x20] sm:$0xff] %v382
    %394 = vst [vmem:[%s5 + $0x28] sm:$0xff] %v384
    %395 = vst [vmem:[%s5 + $0x30] sm:$0xff] %v386
    %396 = vst [vmem:[%s5 + $0x38] sm:$0xff] %v388
    // Predicated region
    $region26: #{policy_forward.1} parent=1 // pred_check
      _
    $region27: #{policy_forward.1} parent=1 // pred_check_branch
      %398 = sbr.rel (0) target = $region29
    $region28: #{policy_forward.1} parent=1 // pred_region
      _
    $region29: #{policy_forward.1} parent=1 // pred_fallthru
      _
    // Predicated region
    $region30: #{policy_forward.1} parent=1 // pred_check
      _
    $region31: #{policy_forward.1} parent=1 // pred_check_branch
      %400 = sbr.rel (0) target = $region33
    $region32: #{policy_forward.1} parent=1 // pred_region
      _
    $region33: #{policy_forward.1} parent=1 // pred_fallthru
      _
    %401 = vsyncpa [#allocation3], 1

</llo_original>
